<compile_context>
chip_gen: v7x
topology: tpu7x:2x2x1
jax: 0.10.0
libtpu: 0.0.40
codegen_flags: <defaults>
</compile_context>

<pallas_src>
import jax
import jax.numpy as jnp
from jax import lax
from jax.experimental import pallas as pl
from jax.experimental.pallas import tpu as pltpu

_LANE = 128


def _make_rnn_chunk_kernel(hidden_size: int, output_size: int, chunk: int):
    H, O, Tc = hidden_size, output_size, chunk

    def kernel(x_ref, h0_ref, wx_ref, wh_ref, b_ref, out_ref, h_scr):
        g = pl.program_id(0)

        # Initialize the carried hidden state before the first chunk.
        @pl.when(g == 0)
        def _():
            h_scr[...] = h0_ref[...]                       # (B, Npad) bf16

        # ---- hoisted loop-invariants (once per Tc timesteps) ----
        wx = wx_ref[...]                                   # (I,    Npad) bf16
        wh = wh_ref[...]                                   # (Npad, Npad) bf16
        bias = b_ref[...]                                  # (1,    Npad) f32
        B, Npad = h_scr.shape
        lane = lax.broadcasted_iota(jnp.int32, (B, Npad), 1)
        is_logit = (lane >= H) & (lane < H + O)

        def step(t, h):
            x = x_ref[t]                                   # (B, I) bf16

            # Merged i2h/i2o GEMM: cols [0:H) -> hidden, [H:H+O) -> logits,
            # [H+O:Npad) -> zero padding.  bf16 operands, f32 accumulation.
            res = (jnp.dot(x, wx, preferred_element_type=jnp.float32)
                   + jnp.dot(h, wh, preferred_element_type=jnp.float32)
                   + bias)                                 # (B, Npad) f32

            # Log-softmax over the O logit lanes, computed on the full padded
            # 128-lane tile so the store stays lane-dense & unmasked.
            masked = jnp.where(is_logit, res, -jnp.inf)
            m = jnp.max(masked, axis=-1, keepdims=True)
            p = jnp.exp(masked - m)                        # exp(-inf)=0 masks
            lse = jnp.log(jnp.sum(p, axis=-1, keepdims=True))
            out = jnp.where(is_logit, res - m - lse, res)
            out_ref[t] = out.astype(out_ref.dtype)

            # Recurrence carried in bf16 vregs; padded wh rows are zero so the
            # extra lanes of res contribute nothing to the next matmul.
            return res.astype(jnp.bfloat16)

        h_final = lax.fori_loop(0, Tc, step, h_scr[...], unroll=True)
        h_scr[...] = h_final

    return kernel


def rnn_sequence(x_seq, h0, wx, wh, b, *, hidden_size, output_size, chunk=8):
    """Run the RNN cell over a whole sequence in a single pallas_call.

    x_seq: (T, B, I) f32      h0: (B, H) f32
    wx:    (I, Npad) bf16     wh: (Npad, Npad) bf16     b: (1, Npad) f32
    Returns (log_probs (T, B, O), hidden_seq (T, B, H)).
    """
    T, B, I = x_seq.shape
    H, O = hidden_size, output_size
    Npad = b.shape[1]

    Tc = min(chunk, T)
    num_chunks = pl.cdiv(T, Tc)
    Tpad = num_chunks * Tc
    if Tpad != T:
        # Padded timesteps come AFTER the real sequence -> never affect
        # real outputs; they are sliced off below.
        x_seq = jnp.pad(x_seq, ((0, Tpad - T), (0, 0), (0, 0)))

    x_bf16 = x_seq.astype(jnp.bfloat16)
    h0_pad = jnp.pad(h0, ((0, 0), (0, Npad - H))).astype(jnp.bfloat16)

    out_seq = pl.pallas_call(
        _make_rnn_chunk_kernel(H, O, Tc),
        out_shape=jax.ShapeDtypeStruct((Tpad, B, Npad), jnp.float32),
        grid_spec=pltpu.PrefetchScalarGridSpec(
            num_scalar_prefetch=0,
            grid=(num_chunks,),
            in_specs=[
                # x chunk streamed per grid step (auto double-buffered).
                pl.BlockSpec((Tc, B, I), lambda g: (g, 0, 0)),
                # h0, weights and bias: index_map ignores g -> VMEM-resident.
                pl.BlockSpec((B, Npad), lambda g: (0, 0)),
                pl.BlockSpec((I, Npad), lambda g: (0, 0)),
                pl.BlockSpec((Npad, Npad), lambda g: (0, 0)),
                pl.BlockSpec((1, Npad), lambda g: (0, 0)),
            ],
            out_specs=pl.BlockSpec((Tc, B, Npad), lambda g: (g, 0, 0)),
            scratch_shapes=[pltpu.VMEM((B, Npad), jnp.bfloat16)],
        ),
        compiler_params=pltpu.CompilerParams(
            dimension_semantics=("arbitrary",)),
    )(x_bf16, h0_pad, wx, wh, b)

    out_seq = out_seq[:T]
    hidden_seq = out_seq[:, :, :H]          # raw i2h output (f32)
    log_probs = out_seq[:, :, H:H + O]      # log_softmax(i2o output)
    return log_probs, hidden_seq


def rnn_forward(x, h, wx, wh, b, *, hidden_size, output_size):
    """Single-step forward: same semantics as RNN.forward(input, hidden)."""
    log_probs, hidden_seq = rnn_sequence(
        x[None], h, wx, wh, b,
        hidden_size=hidden_size, output_size=output_size, chunk=1)
    return log_probs[0], hidden_seq[0]


def init_params(key, input_size, hidden_size, output_size, dtype=jnp.float32):
    """nn.Linear-style params: W (out, in), b (out,), U(-1/sqrt(fan_in), ..)."""
    fan_in = input_size + hidden_size
    k = 1.0 / float(fan_in) ** 0.5
    k1, k2, k3, k4 = jax.random.split(key, 4)
    w_i2h = jax.random.uniform(k1, (hidden_size, fan_in), dtype, -k, k)
    b_i2h = jax.random.uniform(k2, (hidden_size,), dtype, -k, k)
    w_i2o = jax.random.uniform(k3, (output_size, fan_in), dtype, -k, k)
    b_i2o = jax.random.uniform(k4, (output_size,), dtype, -k, k)
    return w_i2h, b_i2h, w_i2o, b_i2o


def prepare_params(w_i2h, b_i2h, w_i2o, b_i2o, input_size, lane=_LANE):
    """Fuse i2h/i2o into one padded weight slab, split x/h rows, cast bf16.

    Returns wx (I, Npad), wh (Npad, Npad) [rows >= H are zero], b (1, Npad).
    """
    H = w_i2h.shape[0]
    O = w_i2o.shape[0]
    W = jnp.concatenate([w_i2h.T, w_i2o.T], axis=1)      # (I+H, H+O)
    bias = jnp.concatenate([b_i2h, b_i2o])[None, :]      # (1, H+O)
    n = H + O
    npad = ((n + lane - 1) // lane) * lane
    W = jnp.pad(W, ((0, 0), (0, npad - n)))
    bias = jnp.pad(bias, ((0, 0), (0, npad - n)))
    wx = W[:input_size].astype(jnp.bfloat16)             # (I, Npad)
    wh = jnp.pad(W[input_size:], ((0, npad - H), (0, 0))).astype(jnp.bfloat16)
    return wx, wh, bias.astype(jnp.float32)


if __name__ == "__main__":
    batch, input_size, hidden_size, output_size = 8, 32, 32, 16
    seq_len, chunk = 16, 8                     # grid of 2 chunks of 8 steps

    key = jax.random.PRNGKey(0)
    kx, kp = jax.random.split(key)
    x_seq = jax.random.normal(kx, (seq_len, batch, input_size), jnp.float32)
    h0 = jnp.zeros((batch, hidden_size), jnp.float32)   # initHidden()

    w_i2h, b_i2h, w_i2o, b_i2o = init_params(
        kp, input_size, hidden_size, output_size)
    wx, wh, b = prepare_params(w_i2h, b_i2h, w_i2o, b_i2o, input_size)
    Npad = b.shape[1]

    # Single-step forward (matches the module's forward semantics).
    out1, hid1 = rnn_forward(x_seq[0], h0, wx, wh, b,
                             hidden_size=hidden_size, output_size=output_size)
    # Fused whole-sequence forward (one pallas_call for all timesteps).
    out_seq, hid_seq = rnn_sequence(x_seq, h0, wx, wh, b,
                                    hidden_size=hidden_size,
                                    output_size=output_size, chunk=chunk)
    jax.block_until_ready((out1, hid1, out_seq, hid_seq))

    # Reference A: PyTorch-equivalent f32 math (loose tol: kernel uses bf16
    # MXU operands with f32 accumulation).
    comb = jnp.concatenate([x_seq[0], h0], axis=1)
    hid_ref_f32 = comb @ w_i2h.T + b_i2h
    out_ref_f32 = jax.nn.log_softmax(comb @ w_i2o.T + b_i2o, axis=1)
    assert jnp.allclose(hid1, hid_ref_f32, atol=5e-2, rtol=5e-2)
    assert jnp.allclose(out1, out_ref_f32, atol=5e-2, rtol=5e-2)

    # Reference B: same bf16-operand / bf16-carry math as the kernel.
    def ref_step(x_f32, h_pad_bf16):
        res = (jnp.dot(x_f32.astype(jnp.bfloat16), wx,
                       preferred_element_type=jnp.float32)
               + jnp.dot(h_pad_bf16, wh, preferred_element_type=jnp.float32)
               + b)                                       # (B, Npad) f32
        hid = res[:, :hidden_size]
        logp = jax.nn.log_softmax(
            res[:, hidden_size:hidden_size + output_size], axis=1)
        return logp, hid, res.astype(jnp.bfloat16)

    h_pad = jnp.zeros((batch, Npad), jnp.bfloat16)
    for t in range(seq_len):
        logp_ref, hid_ref, h_pad = ref_step(x_seq[t], h_pad)
        assert jnp.allclose(out_seq[t], logp_ref, atol=1e-3, rtol=1e-3)
        assert jnp.allclose(hid_seq[t], hid_ref, atol=1e-3, rtol=1e-3)

    print("KERNEL_OK")
</pallas_src>

<mosaic_0001>
module attributes {stable_mosaic.version = 11 : i64} {
  func.func @kernel(%arg0: i32, %arg1: memref<1x8x32xbf16, #tpu.memory_space<vmem>>, %arg2: memref<8x128xbf16, #tpu.memory_space<vmem>>, %arg3: memref<32x128xbf16, #tpu.memory_space<vmem>>, %arg4: memref<128x128xbf16, #tpu.memory_space<vmem>>, %arg5: memref<1x128xf32, #tpu.memory_space<vmem>>, %arg6: memref<1x8x128xf32, #tpu.memory_space<vmem>>, %arg7: memref<8x128xbf16, #tpu.memory_space<vmem>>) attributes {dimension_semantics = [#tpu.dimension_semantics<arbitrary>], iteration_bounds = array<i64: 1>, scalar_prefetch = 0 : i64, scratch_operands = 1 : i64, tpu.core_type = #tpu.core_type<tc>, window_params = [{transform_indices = @transform_0, window_bounds = array<i64: 1, 8, 32>}, {pipeline_mode = #tpu.pipeline_mode<synchronous>, transform_indices = @transform_1, window_bounds = array<i64: 8, 128>}, {pipeline_mode = #tpu.pipeline_mode<synchronous>, transform_indices = @transform_2, window_bounds = array<i64: 32, 128>}, {pipeline_mode = #tpu.pipeline_mode<synchronous>, transform_indices = @transform_3, window_bounds = array<i64: 128, 128>}, {pipeline_mode = #tpu.pipeline_mode<synchronous>, transform_indices = @transform_4, window_bounds = array<i64: 1, 128>}, {transform_indices = @transform_5, window_bounds = array<i64: 1, 8, 128>}]} {
    %c0_i32 = arith.constant 0 : i32
    %0 = arith.cmpi eq, %arg0, %c0_i32 : i32
    %1 = arith.extui %0 : i1 to i32
    %c0_i32_0 = arith.constant 0 : i32
    %2 = arith.cmpi ne, %1, %c0_i32_0 : i32
    scf.if %2 {
      %c0_19 = arith.constant 0 : index
      %c0_20 = arith.constant 0 : index
      %42 = vector.load %arg2[%c0_19, %c0_20] : memref<8x128xbf16, #tpu.memory_space<vmem>>, vector<8x128xbf16>
      %c0_21 = arith.constant 0 : index
      %c0_22 = arith.constant 0 : index
      %43 = vector.load %arg7[%c0_21, %c0_22] : memref<8x128xbf16, #tpu.memory_space<vmem>>, vector<8x128xbf16>
      tpu.vector_store %arg7[%c0_21, %c0_22], %42 {strides = array<i32>} : memref<8x128xbf16, #tpu.memory_space<vmem>>, vector<8x128xbf16>,
    } else {
    }
    %c0 = arith.constant 0 : index
    %c0_1 = arith.constant 0 : index
    %3 = vector.load %arg3[%c0, %c0_1] : memref<32x128xbf16, #tpu.memory_space<vmem>>, vector<32x128xbf16>
    %c0_2 = arith.constant 0 : index
    %c0_3 = arith.constant 0 : index
    %4 = vector.load %arg4[%c0_2, %c0_3] : memref<128x128xbf16, #tpu.memory_space<vmem>>, vector<128x128xbf16>
    %c0_4 = arith.constant 0 : index
    %c0_5 = arith.constant 0 : index
    %5 = vector.load %arg5[%c0_4, %c0_5] : memref<1x128xf32, #tpu.memory_space<vmem>>, vector<1x128xf32>
    %6 = tpu.iota {dimensions = array<i32: 1>} : vector<8x128xi32>
    %c32_i32 = arith.constant 32 : i32
    %7 = vector.broadcast %c32_i32 : i32 to vector<8x128xi32>
    %8 = arith.cmpi sge, %6, %7 : vector<8x128xi32>
    %c48_i32 = arith.constant 48 : i32
    %9 = vector.broadcast %c48_i32 : i32 to vector<8x128xi32>
    %10 = arith.cmpi slt, %6, %9 : vector<8x128xi32>
    %11 = arith.andi %8, %10 : vector<8x128xi1>
    %c0_6 = arith.constant 0 : index
    %c0_7 = arith.constant 0 : index
    %12 = vector.load %arg7[%c0_6, %c0_7] : memref<8x128xbf16, #tpu.memory_space<vmem>>, vector<8x128xbf16>
    %c0_i32_8 = arith.constant 0 : i32
    %13 = arith.index_cast %c0_i32_8 : i32 to index
    %c0_9 = arith.constant 0 : index
    %c0_10 = arith.constant 0 : index
    %14 = vector.load %arg1[%13, %c0_9, %c0_10] : memref<1x8x32xbf16, #tpu.memory_space<vmem>>, vector<1x8x32xbf16>
    %15 = vector.shape_cast %14 : vector<1x8x32xbf16> to vector<8x32xbf16>
    %cst = arith.constant dense<0.000000e+00> : vector<8x128xf32>
    %16 = tpu.matmul %15, %3, %cst {dimension_numbers = #tpu.dot_dimension_numbers<[1], [0], [0], [1], [0, 0, 1, 1], [], []>} : vector<8x32xbf16>, vector<32x128xbf16>, vector<8x128xf32> -> vector<8x128xf32>
    %cst_11 = arith.constant dense<0.000000e+00> : vector<8x128xf32>
    %17 = tpu.matmul %12, %4, %cst_11 {dimension_numbers = #tpu.dot_dimension_numbers<[1], [0], [0], [1], [0, 0, 1, 1], [], []>} : vector<8x128xbf16>, vector<128x128xbf16>, vector<8x128xf32> -> vector<8x128xf32>
    %18 = arith.addf %16, %17 : vector<8x128xf32>
    %19 = vector.broadcast %5 : vector<1x128xf32> to vector<8x128xf32>
    %20 = arith.addf %18, %19 : vector<8x128xf32>
    %cst_12 = arith.constant 0xFF800000 : f32
    %21 = vector.broadcast %cst_12 : f32 to vector<8x128xf32>
    %22 = arith.select %11, %20, %21 : vector<8x128xi1>, vector<8x128xf32>
    %cst_13 = arith.constant dense<0xFF800000> : vector<8xf32>
    %23 = vector.multi_reduction <maximumf>, %22, %cst_13 [1] : vector<8x128xf32> to vector<8xf32>
    %24 = vector.shape_cast %23 : vector<8xf32> to vector<8x1xf32>
    %25 = vector.broadcast %24 : vector<8x1xf32> to vector<8x128xf32>
    %26 = arith.subf %22, %25 : vector<8x128xf32>
    %27 = math.exp %26 : vector<8x128xf32>
    %cst_14 = arith.constant dense<0.000000e+00> : vector<8xf32>
    %28 = vector.multi_reduction <add>, %27, %cst_14 [1] : vector<8x128xf32> to vector<8xf32>
    %29 = vector.shape_cast %28 : vector<8xf32> to vector<8x1xf32>
    %30 = math.log %29 : vector<8x1xf32>
    %31 = vector.broadcast %24 : vector<8x1xf32> to vector<8x128xf32>
    %32 = arith.subf %20, %31 : vector<8x128xf32>
    %33 = vector.broadcast %30 : vector<8x1xf32> to vector<8x128xf32>
    %34 = arith.subf %32, %33 : vector<8x128xf32>
    %35 = arith.select %11, %34, %20 : vector<8x128xi1>, vector<8x128xf32>
    %36 = arith.index_cast %c0_i32_8 : i32 to index
    %c0_15 = arith.constant 0 : index
    %c0_16 = arith.constant 0 : index
    %37 = vector.load %arg6[%36, %c0_15, %c0_16] : memref<1x8x128xf32, #tpu.memory_space<vmem>>, vector<1x8x128xf32>
    %38 = vector.shape_cast %37 : vector<1x8x128xf32> to vector<8x128xf32>
    %39 = vector.shape_cast %35 : vector<8x128xf32> to vector<1x8x128xf32>
    tpu.vector_store %arg6[%36, %c0_15, %c0_16], %39 {strides = array<i32>} : memref<1x8x128xf32, #tpu.memory_space<vmem>>, vector<1x8x128xf32>,
    %40 = arith.truncf %20 : vector<8x128xf32> to vector<8x128xbf16>
    %c1_i32 = arith.constant 1 : i32
    %c0_17 = arith.constant 0 : index
    %c0_18 = arith.constant 0 : index
    %41 = vector.load %arg7[%c0_17, %c0_18] : memref<8x128xbf16, #tpu.memory_space<vmem>>, vector<8x128xbf16>
    tpu.vector_store %arg7[%c0_17, %c0_18], %40 {strides = array<i32>} : memref<8x128xbf16, #tpu.memory_space<vmem>>, vector<8x128xbf16>,
    return
  }
  func.func @transform_0(%arg0: i32) -> (i32, i32, i32) {
    %c0_i32 = arith.constant 0 : i32
    %c0_i32_0 = arith.constant 0 : i32
    %c0_i32_1 = arith.constant 0 : i32
    return %arg0, %c0_i32, %c0_i32_0 : i32, i32, i32
  }
  func.func @transform_1(%arg0: i32) -> (i32, i32) {
    %c0_i32 = arith.constant 0 : i32
    %c0_i32_0 = arith.constant 0 : i32
    %c0_i32_1 = arith.constant 0 : i32
    return %c0_i32, %c0_i32_0 : i32, i32
  }
  func.func @transform_2(%arg0: i32) -> (i32, i32) {
    %c0_i32 = arith.constant 0 : i32
    %c0_i32_0 = arith.constant 0 : i32
    %c0_i32_1 = arith.constant 0 : i32
    return %c0_i32, %c0_i32_0 : i32, i32
  }
  func.func @transform_3(%arg0: i32) -> (i32, i32) {
    %c0_i32 = arith.constant 0 : i32
    %c0_i32_0 = arith.constant 0 : i32
    %c0_i32_1 = arith.constant 0 : i32
    return %c0_i32, %c0_i32_0 : i32, i32
  }
  func.func @transform_4(%arg0: i32) -> (i32, i32) {
    %c0_i32 = arith.constant 0 : i32
    %c0_i32_0 = arith.constant 0 : i32
    %c0_i32_1 = arith.constant 0 : i32
    return %c0_i32, %c0_i32_0 : i32, i32
  }
  func.func @transform_5(%arg0: i32) -> (i32, i32, i32) {
    %c0_i32 = arith.constant 0 : i32
    %c0_i32_0 = arith.constant 0 : i32
    %c0_i32_1 = arith.constant 0 : i32
    return %arg0, %c0_i32, %c0_i32_0 : i32, i32, i32
  }
}

</mosaic_0001>

<llo_original>
// kernel: tpu_custom_call.1
$region0: #{tpu_custom_call.1}
  #allocation0 [shape = 'u32[]', space=smem, size = 0x4, offset = 0x4, fixed_abs, tag = 'smem constant byte address 0x4 - core index']
  #allocation1 [shape = 'u32[144,128]{1,0:T(1,128)}', space=vmem, size = 0x12000, scoped, tag = 'internal scratch']
  #allocation2 [shape = 'bf16[8,128]{1,0:T(8,128)(2,1)}', space=vmem, size = 0x800, scoped, tag = 'scratch operand']
  %s0 = inlined_call_operand.hbm [shape: bf16[1,8,32], index: 0, kind: input, shape index: {}]
  %s1 = inlined_call_operand.hbm [shape: bf16[8,128], index: 1, kind: input, shape index: {}]
  %s2 = inlined_call_operand.hbm [shape: bf16[32,128], index: 2, kind: input, shape index: {}]
  %s3 = inlined_call_operand.hbm [shape: bf16[128,128], index: 3, kind: input, shape index: {}]
  %s4 = inlined_call_operand.vmem [shape: f32[1,128], index: 4, kind: input, shape index: {}]
  %s5 = inlined_call_operand.hbm [shape: f32[1,8,128], index: 5, kind: output, shape index: {}]
  %s6 = sld [smem:[#allocation0]]
  $region50: #{tpu_custom_call.1} parent=0
    _
  %s8 = ssub.s32 1, %s6
  %s9 = scalar_select 0, %s8, %s6
  $region1: #{tpu_custom_call.1} parent=0
    #allocation3 [shape = 'u8[2048]{0}', space=vmem, size = 0x800, scoped, tag = 'input window, operand 0, single buffered']
    #allocation4 [shape = 's32[1]{0}', space=sflag, size = 0x4, scoped, tag = 'scoped memory for tpu_custom_call.1']
    #allocation5 [shape = 's32[1]{0}', space=sflag, size = 0x4, scoped, tag = 'scoped memory for tpu_custom_call.1']
    #allocation6 [shape = 'u8[2048]{0}', space=vmem, size = 0x800, scoped, tag = 'input window, operand 1, single buffered']
    #allocation7 [shape = 's32[1]{0}', space=sflag, size = 0x4, scoped, tag = 'scoped memory for tpu_custom_call.1']
    #allocation8 [shape = 'u8[8192]{0}', space=vmem, size = 0x2000, scoped, tag = 'input window, operand 2, single buffered']
    #allocation9 [shape = 'u8[32768]{0}', space=vmem, size = 0x8000, scoped, tag = 'input window, operand 3, single buffered']
    #allocation10 [shape = 's32[1]{0}', space=sflag, size = 0x4, scoped, tag = 'scoped memory for tpu_custom_call.1']
    #allocation11 [shape = 'u8[4096]{0}', space=vmem, size = 0x1000, scoped, tag = 'output window, operand 0, single buffered']
    %10 = vsyncpa [#allocation4], 0
    %11 = vsyncpa [#allocation7], 0
    %12 = vsyncpa [#allocation10], 0
    %13 = vsyncpa [#allocation5], 0
    // Predicated region
    $region2: #{tpu_custom_call.1} parent=1 // pred_check
      _
    $region3: #{tpu_custom_call.1} parent=1 // pred_check_branch
      %15 = sbr.rel (0) target = $region5
    $region4: #{tpu_custom_call.1} parent=1 // pred_region
      %s17 = ssub.s32 64, 64
      %18 = vsyncadd [#allocation4], %s17
      %s20 = sshll.u32 [#allocation3], 4
      %s21 = int_to_ptr.vmem [resolvable:$true] %s20
      %23 = dma.hbm_to_vmem [thread:$0]  %s0, 64, %s21, [#allocation4]
    $region5: #{tpu_custom_call.1} parent=1 // pred_fallthru
      _
    // Predicated region
    $region6: #{tpu_custom_call.1} parent=1 // pred_check
      _
    $region7: #{tpu_custom_call.1} parent=1 // pred_check_branch
      %25 = sbr.rel (0) target = $region9
    $region8: #{tpu_custom_call.1} parent=1 // pred_region
      %s27 = ssub.s32 64, 64
      %28 = vsyncadd [#allocation7], %s27
      %s30 = sshll.u32 [#allocation6], 4
      %s31 = int_to_ptr.vmem [resolvable:$true] %s30
      %33 = dma.hbm_to_vmem [thread:$0]  %s1, 64, %s31, [#allocation7]
    $region9: #{tpu_custom_call.1} parent=1 // pred_fallthru
      _
    // Predicated region
    $region10: #{tpu_custom_call.1} parent=1 // pred_check
      _
    $region11: #{tpu_custom_call.1} parent=1 // pred_check_branch
      %35 = sbr.rel (0) target = $region13
    $region12: #{tpu_custom_call.1} parent=1 // pred_region
      %s37 = ssub.s32 256, 256
      %38 = vsyncadd [#allocation7], %s37
      %s39 = sshll.u32 [#allocation8], 4
      %s40 = int_to_ptr.vmem [resolvable:$true] %s39
      %45 = dma.hbm_to_vmem [thread:$0]  %s2, 256, %s40, [#allocation7], 64, 64, 4
    $region13: #{tpu_custom_call.1} parent=1 // pred_fallthru
      _
    // Predicated region
    $region14: #{tpu_custom_call.1} parent=1 // pred_check
      _
    $region15: #{tpu_custom_call.1} parent=1 // pred_check_branch
      %47 = sbr.rel (0) target = $region17
    $region16: #{tpu_custom_call.1} parent=1 // pred_region
      %s49 = ssub.s32 1024, 1024
      %50 = vsyncadd [#allocation10], %s49
      %s51 = sshll.u32 [#allocation9], 4
      %s52 = int_to_ptr.vmem [resolvable:$true] %s51
      %57 = dma.hbm_to_vmem [thread:$0]  %s3, 1024, %s52, [#allocation10], 64, 64, 4
    $region17: #{tpu_custom_call.1} parent=1 // pred_fallthru
      _
    // Predicated region
    $region18: #{tpu_custom_call.1} parent=1 // pred_check
      _
    $region19: #{tpu_custom_call.1} parent=1 // pred_check_branch
      %59 = sbr.rel (0) target = $region21
    $region20: #{tpu_custom_call.1} parent=1 // pred_region
      _
    $region21: #{tpu_custom_call.1} parent=1 // pred_fallthru
      _
    // Predicated region
    $region22: #{tpu_custom_call.1} parent=1 // pred_check
      _
    $region23: #{tpu_custom_call.1} parent=1 // pred_check_branch
      %61 = sbr.rel (0) target = $region25
    $region24: #{tpu_custom_call.1} parent=1 // pred_region
      %62 = dma.done [#allocation4], 64
    $region25: #{tpu_custom_call.1} parent=1 // pred_fallthru
      _
    // Predicated region
    $region26: #{tpu_custom_call.1} parent=1 // pred_check
      _
    $region27: #{tpu_custom_call.1} parent=1 // pred_check_branch
      %64 = sbr.rel (0) target = $region29
    $region28: #{tpu_custom_call.1} parent=1 // pred_region
      %65 = dma.done [#allocation7], 64
    $region29: #{tpu_custom_call.1} parent=1 // pred_fallthru
      _
    // Predicated region
    $region30: #{tpu_custom_call.1} parent=1 // pred_check
      _
    $region31: #{tpu_custom_call.1} parent=1 // pred_check_branch
      %67 = sbr.rel (0) target = $region33
    $region32: #{tpu_custom_call.1} parent=1 // pred_region
      %68 = dma.done [#allocation7], 256
    $region33: #{tpu_custom_call.1} parent=1 // pred_fallthru
      _
    // Predicated region
    $region34: #{tpu_custom_call.1} parent=1 // pred_check
      _
    $region35: #{tpu_custom_call.1} parent=1 // pred_check_branch
      %70 = sbr.rel (0) target = $region37
    $region36: #{tpu_custom_call.1} parent=1 // pred_region
      %71 = dma.done [#allocation10], 1024
    $region37: #{tpu_custom_call.1} parent=1 // pred_fallthru
      _
    %p73 = scmp.eq.s32.totalorder 0, 0
    // Predicated region
    $region38: #{tpu_custom_call.1} parent=1 // pred_check
      %p74 = pneg %p73
    $region39: #{tpu_custom_call.1} parent=1 // pred_check_branch
      %76 = sbr.rel (%p74) target = $region41
    $region40: #{tpu_custom_call.1} parent=1 // pred_region
      %v77 = vld [vmem:[#allocation6] sm:$0xf]
      %78 = vst [vmem:[#allocation2] sm:$0xf] %v77
    $region41: #{tpu_custom_call.1} parent=1 // pred_fallthru
      _
    %v79 = vld [vmem:[#allocation8] sm:$0xf]
    %v80 = vld [vmem:[#allocation8 + $0x4] sm:$0xf]
    %v81 = vld [vmem:[#allocation8 + $0x8] sm:$0xf]
    %v82 = vld [vmem:[#allocation8 + $0xc] sm:$0xf]
    %v83 = vld [vmem:[#allocation9] sm:$0xf]
    %v84 = vld [vmem:[#allocation9 + $0x4] sm:$0xf]
    %v85 = vld [vmem:[#allocation9 + $0x8] sm:$0xf]
    %v86 = vld [vmem:[#allocation9 + $0xc] sm:$0xf]
    %v87 = vld [vmem:[#allocation9 + $0x10] sm:$0xf]
    %v88 = vld [vmem:[#allocation9 + $0x14] sm:$0xf]
    %v89 = vld [vmem:[#allocation9 + $0x18] sm:$0xf]
    %v90 = vld [vmem:[#allocation9 + $0x1c] sm:$0xf]
    %v91 = vld [vmem:[#allocation9 + $0x20] sm:$0xf]
    %v92 = vld [vmem:[#allocation9 + $0x24] sm:$0xf]
    %v93 = vld [vmem:[#allocation9 + $0x28] sm:$0xf]
    %v94 = vld [vmem:[#allocation9 + $0x2c] sm:$0xf]
    %v95 = vld [vmem:[#allocation9 + $0x30] sm:$0xf]
    %v96 = vld [vmem:[#allocation9 + $0x34] sm:$0xf]
    %v97 = vld [vmem:[#allocation9 + $0x38] sm:$0xf]
    %v98 = vld [vmem:[#allocation9 + $0x3c] sm:$0xf]
    %v99 = vld [vmem:[%s4] sm:$0x1]
    %v100 = vlaneseq
    %v101 = vand.u32 %v100, 127
    %vm102 = vcmp.ge.s32.totalorder %v101, 32
    %vm103 = vcmp.lt.s32.totalorder %v101, 48
    %vm104 = vmand %vm102, %vm103
    %v105 = vld [vmem:[#allocation2] sm:$0xf]
    %v106 = vld [vmem:[#allocation3] sm:$0xf]
    %v123 = vunpack.c.l.b16 %v83
    %v124 = vunpack.c.l.b16 %v84
    %v125 = vunpack.c.l.b16 %v85
    %v126 = vunpack.c.l.b16 %v86
    %v127 = vunpack.c.l.b16 %v87
    %v128 = vunpack.c.l.b16 %v88
    %v129 = vunpack.c.l.b16 %v89
    %v130 = vunpack.c.l.b16 %v90
    %v131 = vunpack.c.l.b16 %v91
    %v132 = vunpack.c.l.b16 %v92
    %v133 = vunpack.c.l.b16 %v93
    %v134 = vunpack.c.l.b16 %v94
    %v135 = vunpack.c.l.b16 %v95
    %v136 = vunpack.c.l.b16 %v96
    %v137 = vunpack.c.l.b16 %v97
    %v138 = vunpack.c.l.b16 %v98
    %v139 = vpack.c.b16 %v124, %v123
    %v140 = vpack.c.b16 %v126, %v125
    %v141 = vpack.c.b16 %v128, %v127
    %v142 = vpack.c.b16 %v130, %v129
    %v143 = vpack.c.b16 %v132, %v131
    %v144 = vpack.c.b16 %v134, %v133
    %v145 = vpack.c.b16 %v136, %v135
    %v146 = vpack.c.b16 %v138, %v137
    %155 = vmatprep.subr.bf16.mxu0 0
    %156 = vmatpush1.bf16.msra.mxu0 %v139
    %157 = vmatprep.subr.bf16.mxu0 0
    %158 = vmatpush1.bf16.msra.mxu0 %v140
    %159 = vmatprep.subr.bf16.mxu0 0
    %160 = vmatpush1.bf16.msra.mxu0 %v141
    %161 = vmatprep.subr.bf16.mxu0 0
    %162 = vmatpush1.bf16.msra.mxu0 %v142
    %163 = vmatprep.subr.bf16.mxu0 0
    %164 = vmatpush1.bf16.msra.mxu0 %v143
    %165 = vmatprep.subr.bf16.mxu0 0
    %166 = vmatpush1.bf16.msra.mxu0 %v144
    %167 = vmatprep.subr.bf16.mxu0 0
    %168 = vmatpush1.bf16.msra.mxu0 %v145
    %169 = vmatprep.subr.bf16.mxu0 0
    %170 = vmatpush1.bf16.msra.mxu0 %v146
    %171 = vmatprep.subr.bf16.mxu0 0
    %172 = vmatpush1.bf16.msra.mxu0 0
    %173 = vmatprep.subr.bf16.mxu0 0
    %174 = vmatpush1.bf16.msra.mxu0 0
    %175 = vmatprep.subr.bf16.mxu0 0
    %176 = vmatpush1.bf16.msra.mxu0 0
    %177 = vmatprep.subr.bf16.mxu0 0
    %178 = vmatpush1.bf16.msra.mxu0 0
    %179 = vmatprep.subr.bf16.mxu0 0
    %180 = vmatpush1.bf16.msra.mxu0 0
    %181 = vmatprep.subr.bf16.mxu0 0
    %182 = vmatpush1.bf16.msra.mxu0 0
    %183 = vmatprep.subr.bf16.mxu0 0
    %184 = vmatpush1.bf16.msra.mxu0 0
    %185 = vmatprep.subr.bf16.mxu0 0
    %186 = vmatpush1.bf16.msra.mxu0 0
    %187 = vmatprep.mubr.bf16.mxu0 0
    %188 = vmatmul.mubr.bf16.gmra.mrb[0].mxu0 %v105
    %v189 = vpop.f32.mrb[0].mxu0
    %v190 = vadd.f32 0.0, %v189
    %v191 = vpop.f32.mrb[0].mxu0
    %v192 = vpop.f32.mrb[0].mxu0
    %v193 = vpop.f32.mrb[0].mxu0
    %194 = vdwg.mxu0
    %v199 = vunpack.c.l.b16 %v79
    %v200 = vunpack.c.l.b16 %v80
    %v201 = vunpack.c.l.b16 %v81
    %v202 = vunpack.c.l.b16 %v82
    %v203 = vpack.c.b16 %v200, %v199
    %v204 = vpack.c.b16 %v202, %v201
    %vm207 = vcmask 261120
    %v209 = vsel %vm207, %v106, 0
    %211 = vmatprep.subr.bf16.mxu0 0
    %212 = vmatpush1.bf16.msra.mxu0 %v203
    %213 = vmatprep.subr.bf16.mxu0 0
    %214 = vmatpush1.bf16.msra.mxu0 %v204
    %215 = vmatprep.subr.bf16.mxu0 0
    %216 = vmatpush1.bf16.msra.mxu0 0
    %217 = vmatprep.subr.bf16.mxu0 0
    %218 = vmatpush1.bf16.msra.mxu0 0
    %219 = vmatprep.subr.bf16.mxu0 0
    %220 = vmatpush1.bf16.msra.mxu0 0
    %221 = vmatprep.subr.bf16.mxu0 0
    %222 = vmatpush1.bf16.msra.mxu0 0
    %223 = vmatprep.subr.bf16.mxu0 0
    %224 = vmatpush1.bf16.msra.mxu0 0
    %225 = vmatprep.subr.bf16.mxu0 0
    %226 = vmatpush1.bf16.msra.mxu0 0
    %227 = vmatprep.subr.bf16.mxu0 0
    %228 = vmatpush1.bf16.msra.mxu0 0
    %229 = vmatprep.subr.bf16.mxu0 0
    %230 = vmatpush1.bf16.msra.mxu0 0
    %231 = vmatprep.subr.bf16.mxu0 0
    %232 = vmatpush1.bf16.msra.mxu0 0
    %233 = vmatprep.subr.bf16.mxu0 0
    %234 = vmatpush1.bf16.msra.mxu0 0
    %235 = vmatprep.subr.bf16.mxu0 0
    %236 = vmatpush1.bf16.msra.mxu0 0
    %237 = vmatprep.subr.bf16.mxu0 0
    %238 = vmatpush1.bf16.msra.mxu0 0
    %239 = vmatprep.subr.bf16.mxu0 0
    %240 = vmatpush1.bf16.msra.mxu0 0
    %241 = vmatprep.subr.bf16.mxu0 0
    %242 = vmatpush1.bf16.msra.mxu0 0
    %243 = vmatprep.mubr.bf16.mxu0 0
    %244 = vmatmul.mubr.bf16.gmra.mrb[0].mxu0 %v209
    %v245 = vpop.f32.mrb[0].mxu0
    %v246 = vadd.f32 %v190, %v245
    %v247 = vpop.f32.mrb[0].mxu0
    %v248 = vpop.f32.mrb[0].mxu0
    %v249 = vpop.f32.mrb[0].mxu0
    %250 = vdwg.mxu0
    %v252 = vlaneseq
    %v253 = vshrl.u32 %v252, 7
    %v254 = vsub.s32 0, %v253
    %v255 = vrot.slane %v99, %v254
    %v257 = vadd.f32 %v246, %v255
    %v258 = vsel %vm104, %v257, -inf
    %259 = vmax.xlane.f32.xlu0 %v258
    %v260 = vpop.xlane.xlu0 %259
    %v261 = vsub.f32 %v258, %v260
    %v262 = vmul.f32 %v261, 1.442695
    %v263 = vpow.pop %v262
    %264 = vadd.xlane.f32.xlu0 %v263
    %v265 = vpop.xlane.xlu0 %264
    %v266 = vlog2.pop %v265
    %v267 = vmul.f32 %v266, 0.6931472
    %v268 = vsub.f32 %v257, %v260
    %v269 = vsub.f32 %v268, %v267
    %v270 = vsel %vm104, %v269, %v257
    %271 = vst [vmem:[#allocation11] sm:$0xff] %v270
    %v272 = vpack.c.bf16 %v257, %v257
    %273 = vst [vmem:[#allocation2] sm:$0xf] %v272
    // Predicated region
    $region42: #{tpu_custom_call.1} parent=1 // pred_check
      _
    $region43: #{tpu_custom_call.1} parent=1 // pred_check_branch
      %275 = sbr.rel (0) target = $region45
    $region44: #{tpu_custom_call.1} parent=1 // pred_region
      %s277 = ssub.s32 128, 128
      %278 = vsyncadd [#allocation5], %s277
      %s280 = sshll.u32 [#allocation11], 4
      %s281 = int_to_ptr.vmem [resolvable:$true] %s280
      %283 = dma.vmem_to_hbm [thread:$0]  %s281, 128, %s5, [#allocation5]
    $region45: #{tpu_custom_call.1} parent=1 // pred_fallthru
      _
    // Predicated region
    $region46: #{tpu_custom_call.1} parent=1 // pred_check
      _
    $region47: #{tpu_custom_call.1} parent=1 // pred_check_branch
      %285 = sbr.rel (0) target = $region49
    $region48: #{tpu_custom_call.1} parent=1 // pred_region
      %286 = dma.done [#allocation5], 128
    $region49: #{tpu_custom_call.1} parent=1 // pred_fallthru
      _
    %287 = vsyncpa [#allocation4], 1
    %288 = vsyncpa [#allocation7], 1
    %289 = vsyncpa [#allocation10], 1
    %290 = vsyncpa [#allocation5], 1

</llo_original>
